<compile_context>
chip_gen: v7x
topology: tpu7x:2x2x1
jax: 0.10.0
libtpu: 0.0.40
codegen_flags: <defaults>
</compile_context>

<pallas_src>
import functools

import jax
import jax.numpy as jnp
from jax import lax
from jax.experimental import pallas as pl
from jax.experimental.pallas import tpu as pltpu

_LANE = 128


# ------------------------------ Pallas kernel ----------------------------------
def _critic_kernel(x_ref, w1_ref, b1_ref, w2_ref, b2_ref, w3_ref, b3_ref, o_ref,
                   *, act_dtype):
    """One batch tile of the critic forward, feature-major (batch on lanes).

    x_ref : (tb, S)  state tile as stored in HBM (batch on sublanes)
    w1    : (H, S)   b1: (H, 1)   w2: (H, H)   b2: (H, 1)   w3: (H, 1)   b3: (1, 1)
    o_ref : (1, tb)  lane-dense values
    """
    x = x_ref[...]                                                   # (tb, S) f32

    # Layer 1: contract over S against x's minor axis -> (H, tb).  Batch lands on
    # lanes; the implicit RHS transpose is handled by Mosaic (idle XLU / MXU feed).
    pre1 = lax.dot_general(
        w1_ref[...], x, (((1,), (1,)), ((), ())),
        preferred_element_type=jnp.float32) + b1_ref[...]            # (H, tb) f32
    h1 = jnp.tanh(pre1.astype(act_dtype))                            # EUP (bf16 on v6e/v7x)

    # Layer 2: standard (H, H) @ (H, tb) matmul, f32 accumulation.
    pre2 = jnp.dot(w2_ref[...].astype(act_dtype), h1,
                   preferred_element_type=jnp.float32) + b2_ref[...]  # (H, tb) f32
    h2 = jnp.tanh(pre2.astype(act_dtype))                             # (H, tb)

    # Layer 3 (Linear(H, 1)): VPU multiply + sublane (XLU) reduce — no N=1 matmul.
    v = jnp.sum(h2.astype(jnp.float32) * w3_ref[...], axis=0, keepdims=True)
    o_ref[...] = v + b3_ref[...]                                      # (1, tb) f32


# -------------------------------- wrapper ---------------------------------------
def _batch_tile(B, block_b):
    """Lane-aligned batch tile: >=128, <=block_b, and >=2 blocks when B allows (v7x TCs)."""
    full = pl.cdiv(B, _LANE) * _LANE
    tb = min(block_b, full)
    if B >= 2 * _LANE:
        tb = min(tb, pl.cdiv(full, 2 * _LANE) * _LANE)   # ceil(B/2) rounded up to 128
    return max(_LANE, (tb // _LANE) * _LANE)


def critic_forward(x, params, *, block_b=8192, act_dtype=jnp.float32):
    """x: (B, state_dim) -> (B, 1) float32.  params = (w1, b1, w2, b2, w3, b3), torch layout.

    act_dtype=jnp.bfloat16 is recommended on v6e/v7x (EUP/MXU are bf16-native); keep
    float32 on v5e.  Accumulation and the output are always float32.
    """
    w1, b1, w2, b2, w3, b3 = params
    B, S = x.shape
    H = w1.shape[0]

    tb = _batch_tile(B, block_b)
    n_blocks = pl.cdiv(B, tb)

    x = x.astype(jnp.float32)
    w1 = w1.astype(jnp.float32).reshape(H, S)
    b1c = b1.astype(jnp.float32).reshape(H, 1)
    w2 = w2.astype(jnp.float32).reshape(H, H)
    b2c = b2.astype(jnp.float32).reshape(H, 1)
    w3c = w3.astype(jnp.float32).reshape(H, 1)          # == w3.T
    b3c = b3.astype(jnp.float32).reshape(1, 1)

    kernel = functools.partial(_critic_kernel, act_dtype=act_dtype)

    param_bytes = 4 * (H * S + H + H * H + H + H + 1)
    cost = pl.CostEstimate(
        flops=2 * B * (S * H + H * H + H),
        transcendentals=2 * B * H,
        bytes_accessed=4 * B * S + 4 * B + param_bytes,
    )

    out = pl.pallas_call(
        kernel,
        out_shape=jax.ShapeDtypeStruct((1, B), jnp.float32),
        grid=(n_blocks,),
        in_specs=[
            pl.BlockSpec((tb, S), lambda i: (i, 0)),     # x tiles, double-buffered
            pl.BlockSpec((H, S), lambda i: (0, 0)),      # constant index_map ->
            pl.BlockSpec((H, 1), lambda i: (0, 0)),      #   params fetched once,
            pl.BlockSpec((H, H), lambda i: (0, 0)),      #   VMEM-resident
            pl.BlockSpec((H, 1), lambda i: (0, 0)),
            pl.BlockSpec((H, 1), lambda i: (0, 0)),
            pl.BlockSpec((1, 1), lambda i: (0, 0)),
        ],
        out_specs=pl.BlockSpec((1, tb), lambda i: (0, i)),  # lane-dense output block
        compiler_params=pltpu.CompilerParams(
            dimension_semantics=("parallel",),              # batch axis across TCs (v7x)
        ),
        cost_estimate=cost,
    )(x, w1, b1c, w2, b2c, w3c, b3c)                        # (1, B)

    return out.reshape(B, 1)


# --------------------- deterministic parameter init (torch layout) ---------------
def orthogonal_init(key, out_dim, in_dim, gain=1.0):
    """Matches torch.nn.init.orthogonal_ semantics for a (out_dim, in_dim) weight."""
    rows, cols = out_dim, in_dim
    n, m = max(rows, cols), min(rows, cols)
    a = jax.random.normal(key, (n, m), dtype=jnp.float32)
    q, r = jnp.linalg.qr(a)
    d = jnp.diag(r)
    q = q * jnp.where(d >= 0, 1.0, -1.0)                 # make decomposition unique
    if rows < cols:
        q = q.T
    return (gain * q[:rows, :cols]).astype(jnp.float32)


def init_critic_params(key, state_dim, hidden_dim=32):
    k1, k2, k3 = jax.random.split(key, 3)
    w1 = orthogonal_init(k1, hidden_dim, state_dim)      # (H, S)
    b1 = jnp.zeros((hidden_dim,), jnp.float32)
    w2 = orthogonal_init(k2, hidden_dim, hidden_dim)     # (H, H)
    b2 = jnp.zeros((hidden_dim,), jnp.float32)
    w3 = orthogonal_init(k3, 1, hidden_dim)              # (1, H)
    b3 = jnp.zeros((1,), jnp.float32)
    return (w1, b1, w2, b2, w3, b3)


def _reference(x, params):
    w1, b1, w2, b2, w3, b3 = params
    h = jnp.tanh(x @ w1.T + b1)
    h = jnp.tanh(h @ w2.T + b2)
    return h @ w3.T + b3


# ----------------------------------- main -----------------------------------------
if __name__ == "__main__":
    key = jax.random.PRNGKey(0)
    k_params, k_x1, k_x2 = jax.random.split(key, 3)

    state_dim, hidden_dim = 16, 32
    params = init_critic_params(k_params, state_dim, hidden_dim)

    # Small batch (single masked block), f32 path — matches PyTorch to f32 precision.
    x_small = jax.random.normal(k_x1, (8, state_dim), dtype=jnp.float32)
    out_small = critic_forward(x_small, params)
    jax.block_until_ready(out_small)
    ref_small = _reference(x_small, params)
    assert out_small.shape == (8, 1)
    assert jnp.allclose(out_small, ref_small, atol=1e-5, rtol=1e-5)

    # Ragged multi-block batch (no wrapper pad/transpose; boundary block masked), f32.
    x_big = jax.random.normal(k_x2, (300, state_dim), dtype=jnp.float32)
    out_big = critic_forward(x_big, params)
    jax.block_until_ready(out_big)
    ref_big = _reference(x_big, params)
    assert out_big.shape == (300, 1)
    assert jnp.allclose(out_big, ref_big, atol=1e-5, rtol=1e-5)

    # bf16-activation path (recommended on v6e/v7x where tanh/EUP is the roofline).
    out_bf16 = critic_forward(x_big, params, act_dtype=jnp.bfloat16)
    jax.block_until_ready(out_bf16)
    assert jnp.allclose(out_bf16, ref_big, atol=3e-2, rtol=3e-2)

    print("KERNEL_OK")
</pallas_src>

<mosaic_0001>
module attributes {stable_mosaic.version = 11 : i64} {
  func.func @_critic_kernel(%arg0: i32, %arg1: memref<128x16xf32, #tpu.memory_space<vmem>>, %arg2: memref<32x16xf32, #tpu.memory_space<vmem>>, %arg3: memref<32x1xf32, #tpu.memory_space<vmem>>, %arg4: memref<32x32xf32, #tpu.memory_space<vmem>>, %arg5: memref<32x1xf32, #tpu.memory_space<vmem>>, %arg6: memref<32x1xf32, #tpu.memory_space<vmem>>, %arg7: memref<1x1xf32, #tpu.memory_space<vmem>>, %arg8: memref<1x128xf32, #tpu.memory_space<vmem>>) attributes {dimension_semantics = [#tpu.dimension_semantics<parallel>], iteration_bounds = array<i64: 1>, scalar_prefetch = 0 : i64, scratch_operands = 0 : i64, tpu.core_type = #tpu.core_type<tc>, window_params = [{transform_indices = @transform_0, window_bounds = array<i64: 128, 16>}, {pipeline_mode = #tpu.pipeline_mode<synchronous>, transform_indices = @transform_1, window_bounds = array<i64: 32, 16>}, {pipeline_mode = #tpu.pipeline_mode<synchronous>, transform_indices = @transform_2, window_bounds = array<i64: 32, 1>}, {pipeline_mode = #tpu.pipeline_mode<synchronous>, transform_indices = @transform_3, window_bounds = array<i64: 32, 32>}, {pipeline_mode = #tpu.pipeline_mode<synchronous>, transform_indices = @transform_4, window_bounds = array<i64: 32, 1>}, {pipeline_mode = #tpu.pipeline_mode<synchronous>, transform_indices = @transform_5, window_bounds = array<i64: 32, 1>}, {pipeline_mode = #tpu.pipeline_mode<synchronous>, transform_indices = @transform_6, window_bounds = array<i64: 1, 1>}, {transform_indices = @transform_7, window_bounds = array<i64: 1, 128>}]} {
    %c0 = arith.constant 0 : index
    %c0_0 = arith.constant 0 : index
    %0 = vector.load %arg1[%c0, %c0_0] : memref<128x16xf32, #tpu.memory_space<vmem>>, vector<128x16xf32>
    %c0_1 = arith.constant 0 : index
    %c0_2 = arith.constant 0 : index
    %1 = vector.load %arg2[%c0_1, %c0_2] : memref<32x16xf32, #tpu.memory_space<vmem>>, vector<32x16xf32>
    %cst = arith.constant dense<0.000000e+00> : vector<32x128xf32>
    %2 = tpu.matmul %1, %0, %cst {dimension_numbers = #tpu.dot_dimension_numbers<[1], [1], [0], [0], [0, 0, 1, 0], [], []>} : vector<32x16xf32>, vector<128x16xf32>, vector<32x128xf32> -> vector<32x128xf32>
    %c0_3 = arith.constant 0 : index
    %c0_4 = arith.constant 0 : index
    %3 = vector.load %arg3[%c0_3, %c0_4] : memref<32x1xf32, #tpu.memory_space<vmem>>, vector<32x1xf32>
    %4 = vector.broadcast %3 : vector<32x1xf32> to vector<32x128xf32>
    %5 = arith.addf %2, %4 : vector<32x128xf32>
    %6 = math.tanh %5 : vector<32x128xf32>
    %c0_5 = arith.constant 0 : index
    %c0_6 = arith.constant 0 : index
    %7 = vector.load %arg4[%c0_5, %c0_6] : memref<32x32xf32, #tpu.memory_space<vmem>>, vector<32x32xf32>
    %cst_7 = arith.constant dense<0.000000e+00> : vector<32x128xf32>
    %8 = tpu.matmul %7, %6, %cst_7 {dimension_numbers = #tpu.dot_dimension_numbers<[1], [0], [0], [1], [0, 0, 1, 1], [], []>} : vector<32x32xf32>, vector<32x128xf32>, vector<32x128xf32> -> vector<32x128xf32>
    %c0_8 = arith.constant 0 : index
    %c0_9 = arith.constant 0 : index
    %9 = vector.load %arg5[%c0_8, %c0_9] : memref<32x1xf32, #tpu.memory_space<vmem>>, vector<32x1xf32>
    %10 = vector.broadcast %9 : vector<32x1xf32> to vector<32x128xf32>
    %11 = arith.addf %8, %10 : vector<32x128xf32>
    %12 = math.tanh %11 : vector<32x128xf32>
    %c0_10 = arith.constant 0 : index
    %c0_11 = arith.constant 0 : index
    %13 = vector.load %arg6[%c0_10, %c0_11] : memref<32x1xf32, #tpu.memory_space<vmem>>, vector<32x1xf32>
    %14 = vector.broadcast %13 : vector<32x1xf32> to vector<32x128xf32>
    %15 = arith.mulf %12, %14 : vector<32x128xf32>
    %cst_12 = arith.constant dense<0.000000e+00> : vector<128xf32>
    %16 = vector.multi_reduction <add>, %15, %cst_12 [0] : vector<32x128xf32> to vector<128xf32>
    %17 = vector.shape_cast %16 : vector<128xf32> to vector<1x128xf32>
    %c0_13 = arith.constant 0 : index
    %c0_14 = arith.constant 0 : index
    %18 = vector.load %arg7[%c0_13, %c0_14] : memref<1x1xf32, #tpu.memory_space<vmem>>, vector<1x1xf32>
    %19 = vector.broadcast %18 : vector<1x1xf32> to vector<1x128xf32>
    %20 = arith.addf %17, %19 : vector<1x128xf32>
    %c0_15 = arith.constant 0 : index
    %c0_16 = arith.constant 0 : index
    %21 = vector.load %arg8[%c0_15, %c0_16] : memref<1x128xf32, #tpu.memory_space<vmem>>, vector<1x128xf32>
    tpu.vector_store %arg8[%c0_15, %c0_16], %20 {strides = array<i32>} : memref<1x128xf32, #tpu.memory_space<vmem>>, vector<1x128xf32>,
    return
  }
  func.func @transform_0(%arg0: i32) -> (i32, i32) {
    %c0_i32 = arith.constant 0 : i32
    %c0_i32_0 = arith.constant 0 : i32
    return %arg0, %c0_i32 : i32, i32
  }
  func.func @transform_1(%arg0: i32) -> (i32, i32) {
    %c0_i32 = arith.constant 0 : i32
    %c0_i32_0 = arith.constant 0 : i32
    %c0_i32_1 = arith.constant 0 : i32
    return %c0_i32, %c0_i32_0 : i32, i32
  }
  func.func @transform_2(%arg0: i32) -> (i32, i32) {
    %c0_i32 = arith.constant 0 : i32
    %c0_i32_0 = arith.constant 0 : i32
    %c0_i32_1 = arith.constant 0 : i32
    return %c0_i32, %c0_i32_0 : i32, i32
  }
  func.func @transform_3(%arg0: i32) -> (i32, i32) {
    %c0_i32 = arith.constant 0 : i32
    %c0_i32_0 = arith.constant 0 : i32
    %c0_i32_1 = arith.constant 0 : i32
    return %c0_i32, %c0_i32_0 : i32, i32
  }
  func.func @transform_4(%arg0: i32) -> (i32, i32) {
    %c0_i32 = arith.constant 0 : i32
    %c0_i32_0 = arith.constant 0 : i32
    %c0_i32_1 = arith.constant 0 : i32
    return %c0_i32, %c0_i32_0 : i32, i32
  }
  func.func @transform_5(%arg0: i32) -> (i32, i32) {
    %c0_i32 = arith.constant 0 : i32
    %c0_i32_0 = arith.constant 0 : i32
    %c0_i32_1 = arith.constant 0 : i32
    return %c0_i32, %c0_i32_0 : i32, i32
  }
  func.func @transform_6(%arg0: i32) -> (i32, i32) {
    %c0_i32 = arith.constant 0 : i32
    %c0_i32_0 = arith.constant 0 : i32
    %c0_i32_1 = arith.constant 0 : i32
    return %c0_i32, %c0_i32_0 : i32, i32
  }
  func.func @transform_7(%arg0: i32) -> (i32, i32) {
    %c0_i32 = arith.constant 0 : i32
    %c0_i32_0 = arith.constant 0 : i32
    return %c0_i32, %arg0 : i32, i32
  }
}

</mosaic_0001>

<llo_original>
// kernel: tpu_custom_call.1
$region0: #{tpu_custom_call.1}
  #allocation0 [shape = 'u32[]', space=smem, size = 0x4, offset = 0x4, fixed_abs, tag = 'smem constant byte address 0x4 - core index']
  #allocation1 [shape = 'u32[144,128]{1,0:T(1,128)}', space=vmem, size = 0x12000, scoped, tag = 'internal scratch']
  #allocation2 [shape = 'f32[1,1]{1,0:T(1,128)S(1)}', space=vmem, size = 0x200, scoped, tag = 'scoped memory for tpu_custom_call.1']
  %s0 = inlined_call_operand.vmem [shape: f32[8,16], index: 0, kind: input, shape index: {}]
  %s1 = inlined_call_operand.vmem [shape: f32[32,16], index: 1, kind: input, shape index: {}]
  %s2 = inlined_call_operand.vmem [shape: f32[32,1], index: 2, kind: input, shape index: {}]
  %s3 = inlined_call_operand.vmem [shape: f32[32,32], index: 3, kind: input, shape index: {}]
  %s4 = inlined_call_operand.vmem [shape: f32[32,1], index: 4, kind: input, shape index: {}]
  %s5 = inlined_call_operand.vmem [shape: f32[32,1], index: 5, kind: input, shape index: {}]
  %s6 = inlined_call_operand.<no memory space> [shape: f32[1,1], index: 6, kind: input, shape index: {}]
  %s7 = inlined_call_operand.hbm [shape: f32[1,8], index: 7, kind: output, shape index: {}]
  %s8 = sld [smem:[#allocation0]]
  $region38: #{tpu_custom_call.1} parent=0
    _
  %s10 = ssub.s32 1, %s8
  %s11 = scalar_select 0, %s10, %s8
  %v12 = vstv %s6
  %13 = vst [vmem:[#allocation2] sm:$0x1] %v12
  $region1: #{tpu_custom_call.1} parent=0
    #allocation3 [shape = 'u8[512]{0}', space=vmem, size = 0x400, scoped, tag = 'output window, operand 0, single buffered']
    #allocation4 [shape = 's32[1]{0}', space=sflag, size = 0x4, scoped, tag = 'scoped memory for tpu_custom_call.1']
    %14 = vsyncpa [#allocation4], 0
    // Predicated region
    $region2: #{tpu_custom_call.1} parent=1 // pred_check
      _
    $region3: #{tpu_custom_call.1} parent=1 // pred_check_branch
      %16 = sbr.rel (0) target = $region5
    $region4: #{tpu_custom_call.1} parent=1 // pred_region
      _
    $region5: #{tpu_custom_call.1} parent=1 // pred_fallthru
      _
    // Predicated region
    $region6: #{tpu_custom_call.1} parent=1 // pred_check
      _
    $region7: #{tpu_custom_call.1} parent=1 // pred_check_branch
      %18 = sbr.rel (0) target = $region9
    $region8: #{tpu_custom_call.1} parent=1 // pred_region
      _
    $region9: #{tpu_custom_call.1} parent=1 // pred_fallthru
      _
    // Predicated region
    $region10: #{tpu_custom_call.1} parent=1 // pred_check
      _
    $region11: #{tpu_custom_call.1} parent=1 // pred_check_branch
      %20 = sbr.rel (0) target = $region13
    $region12: #{tpu_custom_call.1} parent=1 // pred_region
      _
    $region13: #{tpu_custom_call.1} parent=1 // pred_fallthru
      _
    // Predicated region
    $region14: #{tpu_custom_call.1} parent=1 // pred_check
      _
    $region15: #{tpu_custom_call.1} parent=1 // pred_check_branch
      %22 = sbr.rel (0) target = $region17
    $region16: #{tpu_custom_call.1} parent=1 // pred_region
      _
    $region17: #{tpu_custom_call.1} parent=1 // pred_fallthru
      _
    // Predicated region
    $region18: #{tpu_custom_call.1} parent=1 // pred_check
      _
    $region19: #{tpu_custom_call.1} parent=1 // pred_check_branch
      %24 = sbr.rel (0) target = $region21
    $region20: #{tpu_custom_call.1} parent=1 // pred_region
      _
    $region21: #{tpu_custom_call.1} parent=1 // pred_fallthru
      _
    // Predicated region
    $region22: #{tpu_custom_call.1} parent=1 // pred_check
      _
    $region23: #{tpu_custom_call.1} parent=1 // pred_check_branch
      %26 = sbr.rel (0) target = $region25
    $region24: #{tpu_custom_call.1} parent=1 // pred_region
      _
    $region25: #{tpu_custom_call.1} parent=1 // pred_fallthru
      _
    // Predicated region
    $region26: #{tpu_custom_call.1} parent=1 // pred_check
      _
    $region27: #{tpu_custom_call.1} parent=1 // pred_check_branch
      %28 = sbr.rel (0) target = $region29
    $region28: #{tpu_custom_call.1} parent=1 // pred_region
      _
    $region29: #{tpu_custom_call.1} parent=1 // pred_fallthru
      _
    %v29 = vld [vmem:[%s0] sm:$0xff]
    %v30 = vld [vmem:[%s0 + $0x8] sm:$0xff]
    %v31 = vld [vmem:[%s0 + $0x10] sm:$0xff]
    %v32 = vld [vmem:[%s0 + $0x18] sm:$0xff]
    %v33 = vld [vmem:[%s0 + $0x20] sm:$0xff]
    %v34 = vld [vmem:[%s0 + $0x28] sm:$0xff]
    %v35 = vld [vmem:[%s0 + $0x30] sm:$0xff]
    %v36 = vld [vmem:[%s0 + $0x38] sm:$0xff]
    %v37 = vld [vmem:[%s0 + $0x40] sm:$0xff]
    %v38 = vld [vmem:[%s0 + $0x48] sm:$0xff]
    %v39 = vld [vmem:[%s0 + $0x50] sm:$0xff]
    %v40 = vld [vmem:[%s0 + $0x58] sm:$0xff]
    %v41 = vld [vmem:[%s0 + $0x60] sm:$0xff]
    %v42 = vld [vmem:[%s0 + $0x68] sm:$0xff]
    %v43 = vld [vmem:[%s0 + $0x70] sm:$0xff]
    %v44 = vld [vmem:[%s0 + $0x78] sm:$0xff]
    %v45 = vld [vmem:[%s1] sm:$0xff]
    %v46 = vld [vmem:[%s1 + $0x8] sm:$0xff]
    %v47 = vld [vmem:[%s1 + $0x10] sm:$0xff]
    %v48 = vld [vmem:[%s1 + $0x18] sm:$0xff]
    %v49 = vld [vmem:[%s2] sm:$0xff]
    %v50 = vld [vmem:[%s2 + $0x8] sm:$0xff]
    %v51 = vld [vmem:[%s2 + $0x10] sm:$0xff]
    %v52 = vld [vmem:[%s2 + $0x18] sm:$0xff]
    %54 = vset.pattern.permute.xlu0 0
    %55 = vperm.xlu0 %54, %v49
    %v56 = vpop.permute.xlu0 %55
    %59 = vset.pattern.permute.xlu0 0
    %60 = vperm.xlu0 %59, %v50
    %v61 = vpop.permute.xlu0 %60
    %64 = vset.pattern.permute.xlu0 0
    %65 = vperm.xlu0 %64, %v51
    %v66 = vpop.permute.xlu0 %65
    %69 = vset.pattern.permute.xlu0 0
    %70 = vperm.xlu0 %69, %v52
    %v71 = vpop.permute.xlu0 %70
    %vm73 = vcmask 130048
    %v75 = vsel %vm73, %v45, 0
    %v78 = vsel %vm73, %v46, 0
    %v81 = vsel %vm73, %v47, 0
    %v84 = vsel %vm73, %v48, 0
    %v87 = vsel %vm73, %v29, 0
    %v90 = vsel %vm73, %v30, 0
    %v93 = vsel %vm73, %v31, 0
    %v96 = vsel %vm73, %v32, 0
    %v99 = vsel %vm73, %v33, 0
    %v102 = vsel %vm73, %v34, 0
    %v105 = vsel %vm73, %v35, 0
    %v108 = vsel %vm73, %v36, 0
    %v111 = vsel %vm73, %v37, 0
    %v114 = vsel %vm73, %v38, 0
    %v117 = vsel %vm73, %v39, 0
    %v120 = vsel %vm73, %v40, 0
    %v123 = vsel %vm73, %v41, 0
    %v126 = vsel %vm73, %v42, 0
    %v129 = vsel %vm73, %v43, 0
    %v132 = vsel %vm73, %v44, 0
    %134 = vmatprep.subr.mxu0 0.0
    %135 = vmatpush1.xpose.msra.mxu0 %v87
    %136 = vmatprep.subr.mxu0 0.0
    %137 = vmatpush1.xpose.msra.mxu0 %v90
    %138 = vmatprep.subr.mxu0 0.0
    %139 = vmatpush1.xpose.msra.mxu0 %v93
    %140 = vmatprep.subr.mxu0 0.0
    %141 = vmatpush1.xpose.msra.mxu0 %v96
    %142 = vmatprep.subr.mxu0 0.0
    %143 = vmatpush1.xpose.msra.mxu0 %v99
    %144 = vmatprep.subr.mxu0 0.0
    %145 = vmatpush1.xpose.msra.mxu0 %v102
    %146 = vmatprep.subr.mxu0 0.0
    %147 = vmatpush1.xpose.msra.mxu0 %v105
    %148 = vmatprep.subr.mxu0 0.0
    %149 = vmatpush1.xpose.msra.mxu0 %v108
    %150 = vmatprep.subr.mxu0 0.0
    %151 = vmatpush1.xpose.msra.mxu0 %v111
    %152 = vmatprep.subr.mxu0 0.0
    %153 = vmatpush1.xpose.msra.mxu0 %v114
    %154 = vmatprep.subr.mxu0 0.0
    %155 = vmatpush1.xpose.msra.mxu0 %v117
    %156 = vmatprep.subr.mxu0 0.0
    %157 = vmatpush1.xpose.msra.mxu0 %v120
    %158 = vmatprep.subr.mxu0 0.0
    %159 = vmatpush1.xpose.msra.mxu0 %v123
    %160 = vmatprep.subr.mxu0 0.0
    %161 = vmatpush1.xpose.msra.mxu0 %v126
    %162 = vmatprep.subr.mxu0 0.0
    %163 = vmatpush1.xpose.msra.mxu0 %v129
    %164 = vmatprep.subr.mxu0 0.0
    %165 = vmatpush1.xpose.msra.mxu0 %v132
    %166 = vmatprep.subr.mxu0 0.0
    %167 = vmatpush1.xpose.msra.mxu0 0.0
    %168 = vmatprep.subr.mxu0 0.0
    %169 = vmatpush1.xpose.msra.mxu0 0.0
    %170 = vmatprep.subr.mxu0 0.0
    %171 = vmatpush1.xpose.msra.mxu0 0.0
    %172 = vmatprep.subr.mxu0 0.0
    %173 = vmatpush1.xpose.msra.mxu0 0.0
    %174 = vmatprep.subr.mxu0 0.0
    %175 = vmatpush1.xpose.msra.mxu0 0.0
    %176 = vmatprep.subr.mxu0 0.0
    %177 = vmatpush1.xpose.msra.mxu0 0.0
    %178 = vmatprep.subr.mxu0 0.0
    %179 = vmatpush1.xpose.msra.mxu0 0.0
    %180 = vmatprep.subr.mxu0 0.0
    %181 = vmatpush1.xpose.msra.mxu0 0.0
    %182 = vmatprep.subr.mxu0 0.0
    %183 = vmatpush1.xpose.msra.mxu0 0.0
    %184 = vmatprep.subr.mxu0 0.0
    %185 = vmatpush1.xpose.msra.mxu0 0.0
    %186 = vmatprep.subr.mxu0 0.0
    %187 = vmatpush1.xpose.msra.mxu0 0.0
    %188 = vmatprep.subr.mxu0 0.0
    %189 = vmatpush1.xpose.msra.mxu0 0.0
    %190 = vmatprep.subr.mxu0 0.0
    %191 = vmatpush1.xpose.msra.mxu0 0.0
    %192 = vmatprep.subr.mxu0 0.0
    %193 = vmatpush1.xpose.msra.mxu0 0.0
    %194 = vmatprep.subr.mxu0 0.0
    %195 = vmatpush1.xpose.msra.mxu0 0.0
    %196 = vmatprep.subr.mxu0 0.0
    %197 = vmatpush1.xpose.msra.mxu0 0.0
    %198 = vmatprep.mubr.f32.mxu0 0.0
    %199 = vmatmul.mubr.f32.gmra.mrb[0].mxu0 %v75
    %v200 = vpop.f32.mrb[0].mxu0
    %v201 = vadd.f32 %v56, %v200
    %v202 = vpop.f32.mrb[0].mxu0
    %203 = vmatprep.mubr.f32.mxu0 0.0
    %204 = vmatmul.mubr.f32.gmra.mrb[0].mxu0 %v78
    %v205 = vpop.f32.mrb[0].mxu0
    %v206 = vadd.f32 %v61, %v205
    %v207 = vpop.f32.mrb[0].mxu0
    %208 = vmatprep.mubr.f32.mxu0 0.0
    %209 = vmatmul.mubr.f32.gmra.mrb[0].mxu0 %v81
    %v210 = vpop.f32.mrb[0].mxu0
    %v211 = vadd.f32 %v66, %v210
    %v212 = vpop.f32.mrb[0].mxu0
    %213 = vmatprep.mubr.f32.mxu0 0.0
    %214 = vmatmul.mubr.f32.gmra.mrb[0].mxu0 %v84
    %v215 = vpop.f32.mrb[0].mxu0
    %v216 = vadd.f32 %v71, %v215
    %v217 = vpop.f32.mrb[0].mxu0
    %218 = vdwg.mxu0
    %v219 = vtanh.pop %v201
    %v220 = vtanh.pop %v206
    %v221 = vtanh.pop %v211
    %v222 = vtanh.pop %v216
    %v223 = vld [vmem:[%s3] sm:$0xff]
    %v224 = vld [vmem:[%s3 + $0x8] sm:$0xff]
    %v225 = vld [vmem:[%s3 + $0x10] sm:$0xff]
    %v226 = vld [vmem:[%s3 + $0x18] sm:$0xff]
    %v227 = vld [vmem:[%s4] sm:$0xff]
    %v228 = vld [vmem:[%s4 + $0x8] sm:$0xff]
    %v229 = vld [vmem:[%s4 + $0x10] sm:$0xff]
    %v230 = vld [vmem:[%s4 + $0x18] sm:$0xff]
    %232 = vset.pattern.permute.xlu0 0
    %233 = vperm.xlu0 %232, %v227
    %v234 = vpop.permute.xlu0 %233
    %237 = vset.pattern.permute.xlu0 0
    %238 = vperm.xlu0 %237, %v228
    %v239 = vpop.permute.xlu0 %238
    %242 = vset.pattern.permute.xlu0 0
    %243 = vperm.xlu0 %242, %v229
    %v244 = vpop.permute.xlu0 %243
    %247 = vset.pattern.permute.xlu0 0
    %248 = vperm.xlu0 %247, %v230
    %v249 = vpop.permute.xlu0 %248
    %vm251 = vcmask 261120
    %v253 = vsel %vm251, %v223, 0
    %v256 = vsel %vm251, %v224, 0
    %v259 = vsel %vm251, %v225, 0
    %v262 = vsel %vm251, %v226, 0
    %264 = vmatprep.subr.mxu0 0.0
    %265 = vmatpush1.msra.mxu0 %v219
    %266 = vmatprep.subr.mxu0 0.0
    %267 = vmatpush1.msra.mxu0 %v220
    %268 = vmatprep.subr.mxu0 0.0
    %269 = vmatpush1.msra.mxu0 %v221
    %270 = vmatprep.subr.mxu0 0.0
    %271 = vmatpush1.msra.mxu0 %v222
    %272 = vmatprep.subr.mxu0 0.0
    %273 = vmatpush1.msra.mxu0 0.0
    %274 = vmatprep.subr.mxu0 0.0
    %275 = vmatpush1.msra.mxu0 0.0
    %276 = vmatprep.subr.mxu0 0.0
    %277 = vmatpush1.msra.mxu0 0.0
    %278 = vmatprep.subr.mxu0 0.0
    %279 = vmatpush1.msra.mxu0 0.0
    %280 = vmatprep.subr.mxu0 0.0
    %281 = vmatpush1.msra.mxu0 0.0
    %282 = vmatprep.subr.mxu0 0.0
    %283 = vmatpush1.msra.mxu0 0.0
    %284 = vmatprep.subr.mxu0 0.0
    %285 = vmatpush1.msra.mxu0 0.0
    %286 = vmatprep.subr.mxu0 0.0
    %287 = vmatpush1.msra.mxu0 0.0
    %288 = vmatprep.subr.mxu0 0.0
    %289 = vmatpush1.msra.mxu0 0.0
    %290 = vmatprep.subr.mxu0 0.0
    %291 = vmatpush1.msra.mxu0 0.0
    %292 = vmatprep.subr.mxu0 0.0
    %293 = vmatpush1.msra.mxu0 0.0
    %294 = vmatprep.subr.mxu0 0.0
    %295 = vmatpush1.msra.mxu0 0.0
    %296 = vmatprep.subr.mxu0 0.0
    %297 = vmatpush1.msra.mxu0 0.0
    %298 = vmatprep.subr.mxu0 0.0
    %299 = vmatpush1.msra.mxu0 0.0
    %300 = vmatprep.subr.mxu0 0.0
    %301 = vmatpush1.msra.mxu0 0.0
    %302 = vmatprep.subr.mxu0 0.0
    %303 = vmatpush1.msra.mxu0 0.0
    %304 = vmatprep.subr.mxu0 0.0
    %305 = vmatpush1.msra.mxu0 0.0
    %306 = vmatprep.subr.mxu0 0.0
    %307 = vmatpush1.msra.mxu0 0.0
    %308 = vmatprep.subr.mxu0 0.0
    %309 = vmatpush1.msra.mxu0 0.0
    %310 = vmatprep.subr.mxu0 0.0
    %311 = vmatpush1.msra.mxu0 0.0
    %312 = vmatprep.subr.mxu0 0.0
    %313 = vmatpush1.msra.mxu0 0.0
    %314 = vmatprep.subr.mxu0 0.0
    %315 = vmatpush1.msra.mxu0 0.0
    %316 = vmatprep.subr.mxu0 0.0
    %317 = vmatpush1.msra.mxu0 0.0
    %318 = vmatprep.subr.mxu0 0.0
    %319 = vmatpush1.msra.mxu0 0.0
    %320 = vmatprep.subr.mxu0 0.0
    %321 = vmatpush1.msra.mxu0 0.0
    %322 = vmatprep.subr.mxu0 0.0
    %323 = vmatpush1.msra.mxu0 0.0
    %324 = vmatprep.subr.mxu0 0.0
    %325 = vmatpush1.msra.mxu0 0.0
    %326 = vmatprep.subr.mxu0 0.0
    %327 = vmatpush1.msra.mxu0 0.0
    %328 = vmatprep.mubr.f32.mxu0 0.0
    %329 = vmatmul.mubr.f32.gmra.mrb[0].mxu0 %v253
    %v330 = vpop.f32.mrb[0].mxu0
    %v331 = vadd.f32 %v234, %v330
    %v332 = vpop.f32.mrb[0].mxu0
    %333 = vmatprep.mubr.f32.mxu0 0.0
    %334 = vmatmul.mubr.f32.gmra.mrb[0].mxu0 %v256
    %v335 = vpop.f32.mrb[0].mxu0
    %v336 = vadd.f32 %v239, %v335
    %v337 = vpop.f32.mrb[0].mxu0
    %338 = vmatprep.mubr.f32.mxu0 0.0
    %339 = vmatmul.mubr.f32.gmra.mrb[0].mxu0 %v259
    %v340 = vpop.f32.mrb[0].mxu0
    %v341 = vadd.f32 %v244, %v340
    %v342 = vpop.f32.mrb[0].mxu0
    %343 = vmatprep.mubr.f32.mxu0 0.0
    %344 = vmatmul.mubr.f32.gmra.mrb[0].mxu0 %v262
    %v345 = vpop.f32.mrb[0].mxu0
    %v346 = vadd.f32 %v249, %v345
    %v347 = vpop.f32.mrb[0].mxu0
    %348 = vdwg.mxu0
    %v349 = vtanh.pop %v331
    %v350 = vtanh.pop %v336
    %v351 = vtanh.pop %v341
    %v352 = vtanh.pop %v346
    %v353 = vld [vmem:[%s5] sm:$0xff]
    %v354 = vld [vmem:[%s5 + $0x8] sm:$0xff]
    %v355 = vld [vmem:[%s5 + $0x10] sm:$0xff]
    %v356 = vld [vmem:[%s5 + $0x18] sm:$0xff]
    %358 = vset.pattern.permute.xlu0 0
    %359 = vperm.xlu0 %358, %v353
    %v360 = vpop.permute.xlu0 %359
    %363 = vset.pattern.permute.xlu0 0
    %364 = vperm.xlu0 %363, %v354
    %v365 = vpop.permute.xlu0 %364
    %368 = vset.pattern.permute.xlu0 0
    %369 = vperm.xlu0 %368, %v355
    %v370 = vpop.permute.xlu0 %369
    %373 = vset.pattern.permute.xlu0 0
    %374 = vperm.xlu0 %373, %v356
    %v375 = vpop.permute.xlu0 %374
    %v377 = vmul.f32 %v349, %v360
    %v378 = vmul.f32 %v350, %v365
    %v379 = vmul.f32 %v351, %v370
    %v380 = vmul.f32 %v352, %v375
    %v381 = vadd.f32 %v377, %v378
    %v382 = vadd.f32 %v381, %v379
    %v383 = vadd.f32 %v382, %v380
    %v384 = vrot.slane %v383, 4
    %v385 = vadd.f32 %v383, %v384
    %v386 = vrot.slane %v385, 2
    %v387 = vadd.f32 %v385, %v386
    %v388 = vrot.slane %v387, 1
    %v389 = vadd.f32 %v387, %v388
    %v390 = vld [vmem:[#allocation2] sm:$0x1]
    %392 = vset.pattern.permute.xlu0 0
    %393 = vperm.xlu0 %392, %v390
    %v394 = vpop.permute.xlu0 %393
    %v396 = vlaneseq
    %v397 = vshrl.u32 %v396, 7
    %v398 = vsub.s32 0, %v397
    %v399 = vrot.slane %v394, %v398
    %v400 = vadd.f32 %v389, %v399
    %401 = vst [vmem:[#allocation3] sm:$0x1] %v400
    // Predicated region
    $region30: #{tpu_custom_call.1} parent=1 // pred_check
      _
    $region31: #{tpu_custom_call.1} parent=1 // pred_check_branch
      %403 = sbr.rel (0) target = $region33
    $region32: #{tpu_custom_call.1} parent=1 // pred_region
      %s405 = ssub.s32 16, 16
      %406 = vsyncadd [#allocation4], %s405
      %s408 = sshll.u32 [#allocation3], 4
      %s409 = int_to_ptr.vmem [resolvable:$true] %s408
      %411 = dma.vmem_to_hbm [thread:$0]  %s409, 16, %s7, [#allocation4]
    $region33: #{tpu_custom_call.1} parent=1 // pred_fallthru
      _
    // Predicated region
    $region34: #{tpu_custom_call.1} parent=1 // pred_check
      _
    $region35: #{tpu_custom_call.1} parent=1 // pred_check_branch
      %413 = sbr.rel (0) target = $region37
    $region36: #{tpu_custom_call.1} parent=1 // pred_region
      %414 = dma.done [#allocation4], 16
    $region37: #{tpu_custom_call.1} parent=1 // pred_fallthru
      _
    %415 = vsyncpa [#allocation4], 1

</llo_original>
